<compile_context>
chip_gen: v7x
topology: tpu7x:2x2x1
jax: 0.10.0
libtpu: 0.0.40
codegen_flags: <defaults>
</compile_context>

<pallas_src>
import functools

import jax
import jax.numpy as jnp
from jax.experimental import pallas as pl
from jax.experimental.pallas import tpu as pltpu


# ----------------------------- Pallas kernel --------------------------------
def _token_embed_kernel(x_ref, w_ref, o_ref):
    # x_ref: (Bt, L, c_in)      f32
    # w_ref: (3*c_in, d_model)  f32  (rows: tap k * c_in + c; k=0 -> x[l-1], 1 -> x[l], 2 -> x[l+1])
    # o_ref: (Bt, L, d_model)   out_dtype (f32 by default)
    w = w_ref[...]                                   # VMEM-resident across the whole grid
    x = x_ref[...]                                   # (Bt, L, c_in) f32

    # Circular neighbours along the length axis (per batch row).  Static shifts lower
    # to slice + concatenate in VMEM; negligible next to the output DMA of this
    # memory-bound op.
    x_m1 = jnp.roll(x, 1, axis=1)                    # x[:, (l-1) mod L, :]
    x_p1 = jnp.roll(x, -1, axis=1)                   # x[:, (l+1) mod L, :]

    # Single fused contraction input.  Channel-axis order [x_m1, x, x_p1] matches the
    # (3*c_in, d_model) weight row order (tap -1, tap 0, tap +1).
    xcat = jnp.concatenate([x_m1, x, x_p1], axis=-1)  # (Bt, L, 3*c_in)

    # One 2-D MXU dot per batch row; accumulation stays in the MXU's f32 accumulator.
    # Static unroll is fine: Bt is kept small by the VMEM-budget chooser and the dots
    # are fully hidden under the output DMA.
    for b in range(x_ref.shape[0]):
        o_ref[b] = jnp.dot(xcat[b], w, preferred_element_type=jnp.float32).astype(o_ref.dtype)


# ----------------------------- block-size chooser ----------------------------
def _round_up(v, m):
    return ((v + m - 1) // m) * m


def _choose_batch_tile(B, L, c_in, d_model, vmem_budget_bytes):
    """Largest batch tile Bt (divisor of B) whose double-buffered VMEM footprint fits
    the budget, keeping >= 2 grid steps (when B >= 2) so the 'parallel' batch axis can
    be sharded across both TensorCores on v7x.

    The input block's c_in axis is lane-padded to 128 and L to a multiple of 8 -- that
    ~32x hidden inflation of the tiny-c_in input buffer (double-buffered) is what caps
    Bt for long L on v7x's 64 MiB VMEM, so it is counted explicitly here.
    """
    Lp = _round_up(L, 8)

    def footprint(bt):
        x_blk = bt * Lp * 128 * 4                                  # lane-padded f32 input block
        y_blk = bt * Lp * _round_up(d_model, 128) * 4              # f32 output block
        w_blk = _round_up(3 * c_in, 8) * _round_up(d_model, 128) * 4
        return 2 * (x_blk + y_blk) + 2 * w_blk                     # double buffering

    best = 1
    for bt in range(1, B + 1):
        if B % bt != 0:
            continue
        if B >= 2 and B // bt < 2:      # keep both TCs busy on v7x
            continue
        if footprint(bt) <= vmem_budget_bytes:
            best = bt
    return best


# ------------------------------- forward -------------------------------------
@functools.partial(
    jax.jit, static_argnames=("batch_tile", "vmem_budget_bytes", "out_dtype")
)
def token_embedding_forward(
    x,
    w2d,
    *,
    batch_tile=None,
    vmem_budget_bytes=12 * 1024 * 1024,   # fits under v5e/v6e/v7x default scoped-VMEM limits
    out_dtype=jnp.float32,                # bf16 here halves the dominant HBM write if the consumer tolerates it
):
    """x: (B, L, c_in) float32, w2d: (3*c_in, d_model) float32 -> (B, L, d_model).

    Matches Conv1d(c_in, d_model, k=3, padding=1, padding_mode='circular', bias=False)
    applied to x.permute(0, 2, 1), transposed back.
    """
    B, L, c_in = x.shape
    d_model = w2d.shape[-1]
    assert w2d.shape == (3 * c_in, d_model)

    bt = batch_tile if batch_tile is not None else _choose_batch_tile(
        B, L, c_in, d_model, vmem_budget_bytes
    )
    assert B % bt == 0

    # Memory-bound cost hint for XLA's scheduler.
    flops = 2 * B * L * (3 * c_in) * d_model
    bytes_accessed = (
        B * L * c_in * jnp.dtype(x.dtype).itemsize
        + (3 * c_in) * d_model * jnp.dtype(w2d.dtype).itemsize
        + B * L * d_model * jnp.dtype(out_dtype).itemsize
    )

    return pl.pallas_call(
        _token_embed_kernel,
        out_shape=jax.ShapeDtypeStruct((B, L, d_model), out_dtype),
        grid_spec=pltpu.PrefetchScalarGridSpec(
            num_scalar_prefetch=0,
            grid=(B // bt,),
            in_specs=[
                # Bt full batch rows per step.
                pl.BlockSpec((bt, L, c_in), lambda b: (b, 0, 0)),
                # Full weight, constant index_map -> resident in VMEM for the whole grid.
                pl.BlockSpec((3 * c_in, d_model), lambda b: (0, 0)),
            ],
            # Lane-dense output block whenever d_model is a multiple of 128.
            out_specs=pl.BlockSpec((bt, L, d_model), lambda b: (b, 0, 0)),
        ),
        compiler_params=pltpu.CompilerParams(
            dimension_semantics=("parallel",),  # shard batch steps across TCs (v7x megacore)
            # Only raise the scoped-VMEM limit when a caller asks for blocks larger than
            # the most conservative default (v5e: 16 MiB scoped).
            vmem_limit_bytes=(vmem_budget_bytes + (2 << 20))
            if vmem_budget_bytes > (16 << 20)
            else None,
        ),
        cost_estimate=pl.CostEstimate(
            flops=flops, transcendentals=0, bytes_accessed=bytes_accessed
        ),
    )(x, w2d)


# --------------------------- parameter helpers --------------------------------
def init_token_embedding_params(key, c_in, d_model):
    """Kaiming-normal (mode='fan_in', nonlinearity='leaky_relu', a=0) init of the
    Conv1d weight in PyTorch layout (d_model, c_in, 3), matching nn.init.kaiming_normal_."""
    fan_in = c_in * 3
    gain = 2.0 ** 0.5                     # calculate_gain('leaky_relu', a=0)
    std = gain / (fan_in ** 0.5)
    return jax.random.normal(key, (d_model, c_in, 3), dtype=jnp.float32) * std


def prepare_token_embedding_weight(weight):
    """One-time transform of the PyTorch-layout weight (d_model, c_in, 3) into the
    fused-kernel layout (3*c_in, d_model), f32.  Row = tap*c_in + channel, with
    tap 0 -> x[l-1], tap 1 -> x[l], tap 2 -> x[l+1] (PyTorch circular conv taps)."""
    d_model, c_in, _ = weight.shape
    return jnp.transpose(weight, (2, 1, 0)).reshape(3 * c_in, d_model)


# ------------------------------ reference ------------------------------------
def _reference(x, weight):
    """Pure-JAX circular Conv1d reference (weight in PyTorch layout (d_model, c_in, 3))."""
    x_m1 = jnp.roll(x, 1, axis=1)
    x_p1 = jnp.roll(x, -1, axis=1)
    return (
        jnp.einsum("blc,dc->bld", x_m1, weight[:, :, 0])
        + jnp.einsum("blc,dc->bld", x, weight[:, :, 1])
        + jnp.einsum("blc,dc->bld", x_p1, weight[:, :, 2])
    )


if __name__ == "__main__":
    key = jax.random.PRNGKey(0)
    k_w, k_x = jax.random.split(key)

    # Small demo shapes consistent with the module; d_model multiple of 128 keeps the
    # output stores full-lane; B=8 gives a multi-step grid of multi-row blocks.
    B, L, c_in, d_model = 8, 16, 4, 128

    # Demo-only trick: snap inputs/weights to bf16-representable f32 values so the
    # correctness check is independent of the TPU matmul-precision mode (any bf16 pass
    # is then lossless) and a tight 1e-5 tolerance can be used.  The kernel itself
    # operates on plain f32 arrays exactly as in production.
    def bf16_exact(a):
        return a.astype(jnp.bfloat16).astype(jnp.float32)

    weight = bf16_exact(init_token_embedding_params(k_w, c_in, d_model))  # (d_model, c_in, 3)
    w2d = prepare_token_embedding_weight(weight)                          # (3*c_in, d_model) f32
    x = bf16_exact(jax.random.normal(k_x, (B, L, c_in), dtype=jnp.float32))

    y = token_embedding_forward(x, w2d)
    y = jax.block_until_ready(y)

    y_ref = _reference(x, weight)
    assert y.shape == (B, L, d_model)
    assert y.dtype == jnp.float32
    max_err = float(jnp.max(jnp.abs(y - y_ref)))
    assert jnp.allclose(y, y_ref, atol=1e-5, rtol=1e-5), (
        f"mismatch vs reference (max abs err {max_err})"
    )

    print("KERNEL_OK")
</pallas_src>

<mosaic_0001>
module attributes {stable_mosaic.version = 11 : i64} {
  func.func @_token_embed_kernel(%arg0: i32, %arg1: memref<4x16x4xf32, #tpu.memory_space<vmem>>, %arg2: memref<12x128xf32, #tpu.memory_space<vmem>>, %arg3: memref<4x16x128xf32, #tpu.memory_space<vmem>>) attributes {dimension_semantics = [#tpu.dimension_semantics<parallel>], iteration_bounds = array<i64: 2>, scalar_prefetch = 0 : i64, scratch_operands = 0 : i64, tpu.core_type = #tpu.core_type<tc>, window_params = [{transform_indices = @transform_0, window_bounds = array<i64: 4, 16, 4>}, {pipeline_mode = #tpu.pipeline_mode<synchronous>, transform_indices = @transform_1, window_bounds = array<i64: 12, 128>}, {transform_indices = @transform_2, window_bounds = array<i64: 4, 16, 128>}]} {
    %c0 = arith.constant 0 : index
    %c0_0 = arith.constant 0 : index
    %0 = vector.load %arg2[%c0, %c0_0] : memref<12x128xf32, #tpu.memory_space<vmem>>, vector<12x128xf32>
    %c0_1 = arith.constant 0 : index
    %c0_2 = arith.constant 0 : index
    %c0_3 = arith.constant 0 : index
    %1 = vector.load %arg1[%c0_1, %c0_2, %c0_3] : memref<4x16x4xf32, #tpu.memory_space<vmem>>, vector<4x16x4xf32>
    %2 = vector.extract_strided_slice %1 {offsets = [0, 15, 0], sizes = [4, 1, 4], strides = [1, 1, 1]} : vector<4x16x4xf32> to vector<4x1x4xf32>
    %3 = vector.extract_strided_slice %1 {offsets = [0, 0, 0], sizes = [4, 15, 4], strides = [1, 1, 1]} : vector<4x16x4xf32> to vector<4x15x4xf32>
    %4 = tpu.concatenate %2, %3 in 1 : vector<4x1x4xf32>, vector<4x15x4xf32> -> vector<4x16x4xf32>
    %5 = vector.extract_strided_slice %1 {offsets = [0, 1, 0], sizes = [4, 15, 4], strides = [1, 1, 1]} : vector<4x16x4xf32> to vector<4x15x4xf32>
    %6 = vector.extract_strided_slice %1 {offsets = [0, 0, 0], sizes = [4, 1, 4], strides = [1, 1, 1]} : vector<4x16x4xf32> to vector<4x1x4xf32>
    %7 = tpu.concatenate %5, %6 in 1 : vector<4x15x4xf32>, vector<4x1x4xf32> -> vector<4x16x4xf32>
    %8 = tpu.concatenate %4, %1, %7 in 2 : vector<4x16x4xf32>, vector<4x16x4xf32>, vector<4x16x4xf32> -> vector<4x16x12xf32>
    %9 = vector.extract_strided_slice %8 {offsets = [0, 0, 0], sizes = [1, 16, 12], strides = [1, 1, 1]} : vector<4x16x12xf32> to vector<1x16x12xf32>
    %10 = vector.shape_cast %9 : vector<1x16x12xf32> to vector<16x12xf32>
    %cst = arith.constant dense<0.000000e+00> : vector<16x128xf32>
    %11 = tpu.matmul %10, %0, %cst {dimension_numbers = #tpu.dot_dimension_numbers<[1], [0], [0], [1], [0, 0, 1, 1], [], []>} : vector<16x12xf32>, vector<12x128xf32>, vector<16x128xf32> -> vector<16x128xf32>
    %c0_4 = arith.constant 0 : index
    %c0_5 = arith.constant 0 : index
    %c0_6 = arith.constant 0 : index
    %12 = vector.load %arg3[%c0_4, %c0_5, %c0_6] : memref<4x16x128xf32, #tpu.memory_space<vmem>>, vector<1x16x128xf32>
    %13 = vector.shape_cast %12 : vector<1x16x128xf32> to vector<16x128xf32>
    %14 = vector.shape_cast %11 : vector<16x128xf32> to vector<1x16x128xf32>
    tpu.vector_store %arg3[%c0_4, %c0_5, %c0_6], %14 {strides = array<i32>} : memref<4x16x128xf32, #tpu.memory_space<vmem>>, vector<1x16x128xf32>,
    %15 = vector.extract_strided_slice %8 {offsets = [1, 0, 0], sizes = [1, 16, 12], strides = [1, 1, 1]} : vector<4x16x12xf32> to vector<1x16x12xf32>
    %16 = vector.shape_cast %15 : vector<1x16x12xf32> to vector<16x12xf32>
    %cst_7 = arith.constant dense<0.000000e+00> : vector<16x128xf32>
    %17 = tpu.matmul %16, %0, %cst_7 {dimension_numbers = #tpu.dot_dimension_numbers<[1], [0], [0], [1], [0, 0, 1, 1], [], []>} : vector<16x12xf32>, vector<12x128xf32>, vector<16x128xf32> -> vector<16x128xf32>
    %c1 = arith.constant 1 : index
    %c0_8 = arith.constant 0 : index
    %c0_9 = arith.constant 0 : index
    %18 = vector.load %arg3[%c1, %c0_8, %c0_9] : memref<4x16x128xf32, #tpu.memory_space<vmem>>, vector<1x16x128xf32>
    %19 = vector.shape_cast %18 : vector<1x16x128xf32> to vector<16x128xf32>
    %20 = vector.shape_cast %17 : vector<16x128xf32> to vector<1x16x128xf32>
    tpu.vector_store %arg3[%c1, %c0_8, %c0_9], %20 {strides = array<i32>} : memref<4x16x128xf32, #tpu.memory_space<vmem>>, vector<1x16x128xf32>,
    %21 = vector.extract_strided_slice %8 {offsets = [2, 0, 0], sizes = [1, 16, 12], strides = [1, 1, 1]} : vector<4x16x12xf32> to vector<1x16x12xf32>
    %22 = vector.shape_cast %21 : vector<1x16x12xf32> to vector<16x12xf32>
    %cst_10 = arith.constant dense<0.000000e+00> : vector<16x128xf32>
    %23 = tpu.matmul %22, %0, %cst_10 {dimension_numbers = #tpu.dot_dimension_numbers<[1], [0], [0], [1], [0, 0, 1, 1], [], []>} : vector<16x12xf32>, vector<12x128xf32>, vector<16x128xf32> -> vector<16x128xf32>
    %c2 = arith.constant 2 : index
    %c0_11 = arith.constant 0 : index
    %c0_12 = arith.constant 0 : index
    %24 = vector.load %arg3[%c2, %c0_11, %c0_12] : memref<4x16x128xf32, #tpu.memory_space<vmem>>, vector<1x16x128xf32>
    %25 = vector.shape_cast %24 : vector<1x16x128xf32> to vector<16x128xf32>
    %26 = vector.shape_cast %23 : vector<16x128xf32> to vector<1x16x128xf32>
    tpu.vector_store %arg3[%c2, %c0_11, %c0_12], %26 {strides = array<i32>} : memref<4x16x128xf32, #tpu.memory_space<vmem>>, vector<1x16x128xf32>,
    %27 = vector.extract_strided_slice %8 {offsets = [3, 0, 0], sizes = [1, 16, 12], strides = [1, 1, 1]} : vector<4x16x12xf32> to vector<1x16x12xf32>
    %28 = vector.shape_cast %27 : vector<1x16x12xf32> to vector<16x12xf32>
    %cst_13 = arith.constant dense<0.000000e+00> : vector<16x128xf32>
    %29 = tpu.matmul %28, %0, %cst_13 {dimension_numbers = #tpu.dot_dimension_numbers<[1], [0], [0], [1], [0, 0, 1, 1], [], []>} : vector<16x12xf32>, vector<12x128xf32>, vector<16x128xf32> -> vector<16x128xf32>
    %c3 = arith.constant 3 : index
    %c0_14 = arith.constant 0 : index
    %c0_15 = arith.constant 0 : index
    %30 = vector.load %arg3[%c3, %c0_14, %c0_15] : memref<4x16x128xf32, #tpu.memory_space<vmem>>, vector<1x16x128xf32>
    %31 = vector.shape_cast %30 : vector<1x16x128xf32> to vector<16x128xf32>
    %32 = vector.shape_cast %29 : vector<16x128xf32> to vector<1x16x128xf32>
    tpu.vector_store %arg3[%c3, %c0_14, %c0_15], %32 {strides = array<i32>} : memref<4x16x128xf32, #tpu.memory_space<vmem>>, vector<1x16x128xf32>,
    return
  }
  func.func @transform_0(%arg0: i32) -> (i32, i32, i32) {
    %c0_i32 = arith.constant 0 : i32
    %c0_i32_0 = arith.constant 0 : i32
    %c0_i32_1 = arith.constant 0 : i32
    return %arg0, %c0_i32, %c0_i32_0 : i32, i32, i32
  }
  func.func @transform_1(%arg0: i32) -> (i32, i32) {
    %c0_i32 = arith.constant 0 : i32
    %c0_i32_0 = arith.constant 0 : i32
    %c0_i32_1 = arith.constant 0 : i32
    return %c0_i32, %c0_i32_0 : i32, i32
  }
  func.func @transform_2(%arg0: i32) -> (i32, i32, i32) {
    %c0_i32 = arith.constant 0 : i32
    %c0_i32_0 = arith.constant 0 : i32
    %c0_i32_1 = arith.constant 0 : i32
    return %arg0, %c0_i32, %c0_i32_0 : i32, i32, i32
  }
}

</mosaic_0001>

<llo_original>
// kernel: token_embedding_forward.1
$region0: #{token_embedding_forward.1}
  #allocation0 [shape = 'u32[]', space=smem, size = 0x4, offset = 0x4, fixed_abs, tag = 'smem constant byte address 0x4 - core index']
  #allocation1 [shape = 'u32[144,128]{1,0:T(1,128)}', space=vmem, size = 0x12000, scoped, tag = 'internal scratch']
  %s0 = inlined_call_operand.vmem [shape: f32[8,16,4], index: 0, kind: input, shape index: {}]
  %s1 = inlined_call_operand.vmem [shape: f32[12,128], index: 1, kind: input, shape index: {}]
  %s2 = inlined_call_operand.hbm [shape: f32[8,16,128], index: 2, kind: output, shape index: {}]
  %s3 = sld [smem:[#allocation0]]
  $region41: #{token_embedding_forward.1} parent=0
    _
  %s5 = ssub.s32 1, %s3
  %s6 = scalar_select 0, %s5, %s3
  $region1: #{token_embedding_forward.1} parent=0
    #allocation2 [shape = 'u8[65536]{0}', space=vmem, size = 0x10000, scoped, tag = 'output window, operand 0']
    #allocation3 [shape = 's32[2]{0}', space=sflag, size = 0x8, scoped, tag = 'scoped memory for token_embedding_forward.1']
    %7 = vsyncpa [#allocation3], 0
    %s8 = scalar_lea.sflag [#allocation3], 1
    %9 = vsyncpa %s8, 0
    loop: start=0, step=1, limit=4
    $region2: #{token_embedding_forward.1} parent=1 // loop_pre_header
      _
    $region3: #{token_embedding_forward.1} parent=1 // loop_header
      %s11 = sphi 0, %s15
      %p12 = scmp.ge.s32.totalorder %s11, 4
      %s21 = sphi 0, %s23
      %s24 = sphi 0, %s21
      %s25 = sphi 0, %s24
      %s41 = sphi 0, %s25
      %s45 = sphi 0, %s45
      %s47 = sphi 0, %s45
      %s48 = sphi 0, %s47
      %s62 = sphi 0, %s48
      %s68 = sphi 0, %s70
      %s71 = sphi 0, %s68
      %s72 = sphi 0, %s71
      %s88 = sphi 0, %s72
    $region4: #{token_embedding_forward.1} parent=1 // loop_header_branch
      %14 = sbr.rel (%p12) target = $region8
    $region5: #{token_embedding_forward.1} parent=1 // loop_body
      %s16 = ssub.s32 %s11, 1
      %s17 = ssub.s32 %s11, 2
      %s18 = sadd.s32 %s11, 1
      %s19 = ssub.s32 %s11, %s18
      %p20 = scmp.eq.s32.totalorder %s19, 0
      %s22 = sadd.s32 %s21, 1
      %s23 = scalar_select %p20, %s21, %s22
      %p26 = pneg %p20
      %p27 = scmp.eq.s32.totalorder %s11, 1
      %p28 = por %p26, %p27
      %p29 = scmp.ne.s32.totalorder %s21, %s24
      %p30 = scmp.eq.s32.totalorder %s11, 0
      %p31 = por %p29, %p30
      %p32 = scmp.ne.s32.totalorder %s21, %s24
      %p33 = scmp.eq.s32.totalorder %s16, 1
      %p34 = por %p32, %p33
      %p35 = scmp.ne.s32.totalorder %s24, %s25
      %p36 = scmp.eq.s32.totalorder %s16, 0
      %p37 = por %p35, %p36
      %p38 = scmp.ne.s32.totalorder %s24, %s25
      %p39 = scmp.eq.s32.totalorder %s17, 1
      %p40 = por %p38, %p39
      %p42 = scmp.ne.s32.totalorder %s25, %s41
      %p43 = scmp.eq.s32.totalorder %s17, 0
      %p44 = por %p42, %p43
      %s46 = sadd.s32 %s45, 1
      %p49 = scmp.eq.s32.totalorder %s11, 1
      %p50 = scmp.ne.s32.totalorder %s45, %s47
      %p51 = scmp.eq.s32.totalorder %s11, 0
      %p52 = por %p50, %p51
      %p53 = scmp.ne.s32.totalorder %s45, %s47
      %p54 = scmp.eq.s32.totalorder %s16, 1
      %p55 = por %p53, %p54
      %p56 = scmp.ne.s32.totalorder %s47, %s48
      %p57 = scmp.eq.s32.totalorder %s16, 0
      %p58 = por %p56, %p57
      %p59 = scmp.ne.s32.totalorder %s47, %s48
      %p60 = scmp.eq.s32.totalorder %s17, 1
      %p61 = por %p59, %p60
      %p63 = scmp.ne.s32.totalorder %s48, %s62
      %p64 = scmp.eq.s32.totalorder %s17, 0
      %p65 = por %p63, %p64
      %s66 = ssub.s32 %s11, %s18
      %p67 = scmp.eq.s32.totalorder %s66, 0
      %s69 = sadd.s32 %s68, 1
      %s70 = scalar_select %p67, %s68, %s69
      %p73 = pneg %p67
      %p74 = scmp.eq.s32.totalorder %s11, 1
      %p75 = por %p73, %p74
      %p76 = scmp.ne.s32.totalorder %s68, %s71
      %p77 = scmp.eq.s32.totalorder %s11, 0
      %p78 = por %p76, %p77
      %p79 = scmp.ne.s32.totalorder %s68, %s71
      %p80 = scmp.eq.s32.totalorder %s16, 1
      %p81 = por %p79, %p80
      %p82 = scmp.ne.s32.totalorder %s71, %s72
      %p83 = scmp.eq.s32.totalorder %s16, 0
      %p84 = por %p82, %p83
      %p85 = scmp.ne.s32.totalorder %s71, %s72
      %p86 = scmp.eq.s32.totalorder %s17, 1
      %p87 = por %p85, %p86
      %p89 = scmp.ne.s32.totalorder %s72, %s88
      %p90 = scmp.eq.s32.totalorder %s17, 0
      %p91 = por %p89, %p90
      %p92 = scmp.le.s32.totalorder 1, %s11
      %p93 = scmp.lt.s32.totalorder %s11, 3
      %p94 = pnand %p92, %p93
      %p95 = pneg %p94
      // Predicated region
      $region9: #{token_embedding_forward.1} parent=5 // pred_check
        _
      $region10: #{token_embedding_forward.1} parent=5 // pred_check_branch
        %97 = sbr.rel (%p94) target = $region12
      $region11: #{token_embedding_forward.1} parent=5 // pred_region
        %s98 = ssub.s32 %s11, 1
        // Predicated region
        $region13: #{token_embedding_forward.1} parent=11 // pred_check
          %p99 = pneg %p58
        $region14: #{token_embedding_forward.1} parent=11 // pred_check_branch
          %101 = sbr.rel (%p99) target = $region16
        $region15: #{token_embedding_forward.1} parent=11 // pred_region
          _
        $region16: #{token_embedding_forward.1} parent=11 // pred_fallthru
          _
      $region12: #{token_embedding_forward.1} parent=5 // pred_fallthru
        _
      %p102 = scmp.lt.s32.totalorder %s11, 2
      // Predicated region
      $region17: #{token_embedding_forward.1} parent=5 // pred_check
        %p103 = pneg %p102
      $region18: #{token_embedding_forward.1} parent=5 // pred_check_branch
        %105 = sbr.rel (%p103) target = $region20
      $region19: #{token_embedding_forward.1} parent=5 // pred_region
        // Predicated region
        $region21: #{token_embedding_forward.1} parent=19 // pred_check
          %p106 = pneg %p31
        $region22: #{token_embedding_forward.1} parent=19 // pred_check_branch
          %108 = sbr.rel (%p106) target = $region24
        $region23: #{token_embedding_forward.1} parent=19 // pred_region
          %s109 = smul.u32 4, %s11
          %p110 = scmp.lt.s32.totalorder %s109, 7
          %s111 = scalar_select %p110, %s109, 7
          %s112 = smul.addr %s111, 2
          %s113 = smul.addr %s112, 8
          %s114 = scalar_lea.vmem %s0, %s113
          %s115 = smul.u32 4, %s11
        $region24: #{token_embedding_forward.1} parent=19 // pred_fallthru
          _
      $region20: #{token_embedding_forward.1} parent=5 // pred_fallthru
        _
      %p116 = scmp.le.s32.totalorder 1, %s11
      %p117 = scmp.lt.s32.totalorder %s11, 3
      %p118 = pnand %p116, %p117
      %p119 = pneg %p118
      // Predicated region
      $region25: #{token_embedding_forward.1} parent=5 // pred_check
        _
      $region26: #{token_embedding_forward.1} parent=5 // pred_check_branch
        %121 = sbr.rel (%p118) target = $region28
      $region27: #{token_embedding_forward.1} parent=5 // pred_region
        %s122 = ssub.s32 %s11, 1
        %s123 = smul.u32 4, %s16
        %p124 = scmp.lt.s32.totalorder %s123, 7
        %s125 = scalar_select %p124, %s123, 7
        %s126 = smul.addr %s125, 2
        %s127 = smul.addr %s126, 8
        %s128 = scalar_lea.vmem %s0, %s127
        %p129 = pneg %p37
        %p130 = pneg %p34
        %p131 = pneg %p58
        %p132 = pneg %p55
        %p133 = pneg %p84
        %p134 = pneg %p81
        %s135 = sand.u32 %s71, 1
        %s136 = scalar_lea.sflag [#allocation3], %s135
        %s137 = sand.u32 %s71, 1
        %s138 = smul.addr %s137, 64
        %s139 = scalar_lea.vmem [#allocation2], %s138
        %s140 = smul.u32 4, %s16
        %p141 = scmp.lt.s32.totalorder %s140, 7
        %s142 = scalar_select %p141, %s140, 7
        %s143 = smul.addr %s142, 2
        %s144 = smul.addr %s143, 8
        %s145 = scalar_lea.vmem %s0, %s144
        %s146 = smul.u32 4, %s16
        %s147 = smul.u32 4, %s16
        %v148 = vld [vmem:[%s1] sm:$0xff]
        %v149 = vld [vmem:[%s1 + $0x8] sm:$0xf]
        %v150 = vld [vmem:[%s145] sm:$0xff]
        %v151 = vld [vmem:[%s145 + $0x8] sm:$0xff]
        %v152 = vld [vmem:[%s145 + $0x10] sm:$0xff]
        %v153 = vld [vmem:[%s145 + $0x18] sm:$0xff]
        %v154 = vld [vmem:[%s145 + $0x20] sm:$0xff]
        %v155 = vld [vmem:[%s145 + $0x28] sm:$0xff]
        %v156 = vld [vmem:[%s145 + $0x30] sm:$0xff]
        %v157 = vld [vmem:[%s145 + $0x38] sm:$0xff]
        %v162 = vrot.slane %v151, 7
        %v163 = vrot.slane %v153, 7
        %v164 = vrot.slane %v155, 7
        %v165 = vrot.slane %v157, 7
        %vm174 = vcmask 1040384
        %v175 = vrot.slane %v150, 7
        %v176 = vsel %vm174, %v175, %v162
        %v177 = vrot.slane %v152, 7
        %v178 = vsel %vm174, %v177, %v163
        %v179 = vrot.slane %v154, 7
        %v180 = vsel %vm174, %v179, %v164
        %v181 = vrot.slane %v156, 7
        %v182 = vsel %vm174, %v181, %v165
        %v191 = vsel %vm174, %v162, %v175
        %v192 = vsel %vm174, %v163, %v177
        %v193 = vsel %vm174, %v164, %v179
        %v194 = vsel %vm174, %v165, %v181
        %vm195 = vcmask 1046528
        %v196 = vrot.slane %v150, 1
        %v197 = vrot.slane %v151, 1
        %v198 = vsel %vm195, %v196, %v197
        %v199 = vrot.slane %v152, 1
        %v200 = vrot.slane %v153, 1
        %v201 = vsel %vm195, %v199, %v200
        %v202 = vrot.slane %v154, 1
        %v203 = vrot.slane %v155, 1
        %v204 = vsel %vm195, %v202, %v203
        %v205 = vrot.slane %v156, 1
        %v206 = vrot.slane %v157, 1
        %v207 = vsel %vm195, %v205, %v206
        %v216 = vsel %vm195, %v197, %v196
        %v217 = vsel %vm195, %v200, %v199
        %v218 = vsel %vm195, %v203, %v202
        %v219 = vsel %vm195, %v206, %v205
        %220 = vrot.lane.b32.xlu0 %v150, 4
        %v221 = vpop.permute.xlu0 %220
        %222 = vrot.lane.b32.xlu0 %v151, 4
        %v223 = vpop.permute.xlu0 %222
        %224 = vrot.lane.b32.xlu0 %v152, 4
        %v225 = vpop.permute.xlu0 %224
        %226 = vrot.lane.b32.xlu0 %v153, 4
        %v227 = vpop.permute.xlu0 %226
        %228 = vrot.lane.b32.xlu0 %v154, 4
        %v229 = vpop.permute.xlu0 %228
        %230 = vrot.lane.b32.xlu0 %v155, 4
        %v231 = vpop.permute.xlu0 %230
        %232 = vrot.lane.b32.xlu0 %v156, 4
        %v233 = vpop.permute.xlu0 %232
        %234 = vrot.lane.b32.xlu0 %v157, 4
        %v235 = vpop.permute.xlu0 %234
        %248 = vrot.lane.b32.xlu0 %v198, 8
        %v249 = vpop.permute.xlu0 %248
        %250 = vrot.lane.b32.xlu0 %v216, 8
        %v251 = vpop.permute.xlu0 %250
        %252 = vrot.lane.b32.xlu0 %v201, 8
        %v253 = vpop.permute.xlu0 %252
        %254 = vrot.lane.b32.xlu0 %v217, 8
        %v255 = vpop.permute.xlu0 %254
        %256 = vrot.lane.b32.xlu0 %v204, 8
        %v257 = vpop.permute.xlu0 %256
        %258 = vrot.lane.b32.xlu0 %v218, 8
        %v259 = vpop.permute.xlu0 %258
        %260 = vrot.lane.b32.xlu0 %v207, 8
        %v261 = vpop.permute.xlu0 %260
        %262 = vrot.lane.b32.xlu0 %v219, 8
        %v263 = vpop.permute.xlu0 %262
        %vm272 = vcmask 31744
        %v273 = vsel %vm272, %v191, %v221
        %v274 = vsel %vm272, %v176, %v223
        %v275 = vsel %vm272, %v192, %v225
        %v276 = vsel %vm272, %v178, %v227
        %v277 = vsel %vm272, %v193, %v229
        %v278 = vsel %vm272, %v180, %v231
        %v279 = vsel %vm272, %v194, %v233
        %v280 = vsel %vm272, %v182, %v235
        %vm281 = vcmask 64512
        %v282 = vsel %vm281, %v273, %v249
        %v283 = vsel %vm281, %v274, %v251
        %v284 = vsel %vm281, %v275, %v253
        %v285 = vsel %vm281, %v276, %v255
        %v286 = vsel %vm281, %v277, %v257
        %v287 = vsel %vm281, %v278, %v259
        %v288 = vsel %vm281, %v279, %v261
        %v289 = vsel %vm281, %v280, %v263
        %vm290 = vcmask 97280
        %v292 = vsel %vm290, %v282, 0
        %v295 = vsel %vm290, %v283, 0
        %vm297 = vcmask 1043456
        %v299 = vsel %vm297, %v149, 0
        %301 = vmatprep.subr.mxu0 0.0
        %302 = vmatpush1.msra.mxu0 %v148
        %303 = vmatprep.subr.mxu0 0.0
        %304 = vmatpush1.msra.mxu0 %v299
        %305 = vmatprep.subr.mxu0 0.0
        %306 = vmatpush1.msra.mxu0 0.0
        %307 = vmatprep.subr.mxu0 0.0
        %308 = vmatpush1.msra.mxu0 0.0
        %309 = vmatprep.subr.mxu0 0.0
        %310 = vmatpush1.msra.mxu0 0.0
        %311 = vmatprep.subr.mxu0 0.0
        %312 = vmatpush1.msra.mxu0 0.0
        %313 = vmatprep.subr.mxu0 0.0
        %314 = vmatpush1.msra.mxu0 0.0
        %315 = vmatprep.subr.mxu0 0.0
        %316 = vmatpush1.msra.mxu0 0.0
        %317 = vmatprep.subr.mxu0 0.0
        %318 = vmatpush1.msra.mxu0 0.0
        %319 = vmatprep.subr.mxu0 0.0
        %320 = vmatpush1.msra.mxu0 0.0
        %321 = vmatprep.subr.mxu0 0.0
        %322 = vmatpush1.msra.mxu0 0.0
        %323 = vmatprep.subr.mxu0 0.0
        %324 = vmatpush1.msra.mxu0 0.0
        %325 = vmatprep.subr.mxu0 0.0
        %326 = vmatpush1.msra.mxu0 0.0
        %327 = vmatprep.subr.mxu0 0.0
        %328 = vmatpush1.msra.mxu0 0.0
        %329 = vmatprep.subr.mxu0 0.0
        %330 = vmatpush1.msra.mxu0 0.0
        %331 = vmatprep.subr.mxu0 0.0
        %332 = vmatpush1.msra.mxu0 0.0
        %333 = vmatprep.subr.mxu0 0.0
        %334 = vmatpush1.msra.mxu0 0.0
        %335 = vmatprep.subr.mxu0 0.0
        %336 = vmatpush1.msra.mxu0 0.0
        %337 = vmatprep.subr.mxu0 0.0
        %338 = vmatpush1.msra.mxu0 0.0
        %339 = vmatprep.subr.mxu0 0.0
        %340 = vmatpush1.msra.mxu0 0.0
        %341 = vmatprep.subr.mxu0 0.0
        %342 = vmatpush1.msra.mxu0 0.0
        %343 = vmatprep.subr.mxu0 0.0
        %344 = vmatpush1.msra.mxu0 0.0
        %345 = vmatprep.subr.mxu0 0.0
        %346 = vmatpush1.msra.mxu0 0.0
        %347 = vmatprep.subr.mxu0 0.0
        %348 = vmatpush1.msra.mxu0 0.0
        %349 = vmatprep.subr.mxu0 0.0
        %350 = vmatpush1.msra.mxu0 0.0
        %351 = vmatprep.subr.mxu0 0.0
        %352 = vmatpush1.msra.mxu0 0.0
        %353 = vmatprep.subr.mxu0 0.0
        %354 = vmatpush1.msra.mxu0 0.0
        %355 = vmatprep.subr.mxu0 0.0
        %356 = vmatpush1.msra.mxu0 0.0
        %357 = vmatprep.subr.mxu0 0.0
        %358 = vmatpush1.msra.mxu0 0.0
        %359 = vmatprep.subr.mxu0 0.0
        %360 = vmatpush1.msra.mxu0 0.0
        %361 = vmatprep.subr.mxu0 0.0
        %362 = vmatpush1.msra.mxu0 0.0
        %363 = vmatprep.subr.mxu0 0.0
        %364 = vmatpush1.msra.mxu0 0.0
        %365 = vmatprep.mubr.f32.mxu0 0.0
        %366 = vmatmul.mubr.f32.gmra.mrb[0].mxu0 %v292
        %v367 = vpop.f32.mrb[0].mxu0
        %v368 = vadd.f32 0.0, %v367
        %v369 = vpop.f32.mrb[0].mxu0
        %370 = vmatprep.mubr.f32.mxu0 0.0
        %371 = vmatmul.mubr.f32.gmra.mrb[0].mxu0 %v295
        %v372 = vpop.f32.mrb[0].mxu0
        %v373 = vadd.f32 0.0, %v372
        %v374 = vpop.f32.mrb[0].mxu0
        %375 = vdwg.mxu0
        %376 = vst [vmem:[%s139] sm:$0xff] %v368
        %377 = vst [vmem:[%s139 + $0x8] sm:$0xff] %v373
        %v379 = vsel %vm290, %v284, 0
        %v382 = vsel %vm290, %v285, 0
        %384 = vmatprep.subr.mxu0 0.0
        %385 = vmatpush1.msra.mxu0 %v148
        %386 = vmatprep.subr.mxu0 0.0
        %387 = vmatpush1.msra.mxu0 %v299
        %388 = vmatprep.subr.mxu0 0.0
        %389 = vmatpush1.msra.mxu0 0.0
        %390 = vmatprep.subr.mxu0 0.0
        %391 = vmatpush1.msra.mxu0 0.0
        %392 = vmatprep.subr.mxu0 0.0
        %393 = vmatpush1.msra.mxu0 0.0
        %394 = vmatprep.subr.mxu0 0.0
        %395 = vmatpush1.msra.mxu0 0.0
        %396 = vmatprep.subr.mxu0 0.0
        %397 = vmatpush1.msra.mxu0 0.0
        %398 = vmatprep.subr.mxu0 0.0
        %399 = vmatpush1.msra.mxu0 0.0
        %400 = vmatprep.subr.mxu0 0.0
        %401 = vmatpush1.msra.mxu0 0.0
        %402 = vmatprep.subr.mxu0 0.0
        %403 = vmatpush1.msra.mxu0 0.0
        %404 = vmatprep.subr.mxu0 0.0
        %405 = vmatpush1.msra.mxu0 0.0
        %406 = vmatprep.subr.mxu0 0.0
        %407 = vmatpush1.msra.mxu0 0.0
        %408 = vmatprep.subr.mxu0 0.0
        %409 = vmatpush1.msra.mxu0 0.0
        %410 = vmatprep.subr.mxu0 0.0
        %411 = vmatpush1.msra.mxu0 0.0
        %412 = vmatprep.subr.mxu0 0.0
        %413 = vmatpush1.msra.mxu0 0.0
        %414 = vmatprep.subr.mxu0 0.0
        %415 = vmatpush1.msra.mxu0 0.0
        %416 = vmatprep.subr.mxu0 0.0
        %417 = vmatpush1.msra.mxu0 0.0
        %418 = vmatprep.subr.mxu0 0.0
        %419 = vmatpush1.msra.mxu0 0.0
        %420 = vmatprep.subr.mxu0 0.0
        %421 = vmatpush1.msra.mxu0 0.0
        %422 = vmatprep.subr.mxu0 0.0
        %423 = vmatpush1.msra.mxu0 0.0
        %424 = vmatprep.subr.mxu0 0.0
        %425 = vmatpush1.msra.mxu0 0.0
        %426 = vmatprep.subr.mxu0 0.0
        %427 = vmatpush1.msra.mxu0 0.0
        %428 = vmatprep.subr.mxu0 0.0
        %429 = vmatpush1.msra.mxu0 0.0
        %430 = vmatprep.subr.mxu0 0.0
        %431 = vmatpush1.msra.mxu0 0.0
        %432 = vmatprep.subr.mxu0 0.0
        %433 = vmatpush1.msra.mxu0 0.0
        %434 = vmatprep.subr.mxu0 0.0
        %435 = vmatpush1.msra.mxu0 0.0
        %436 = vmatprep.subr.mxu0 0.0
        %437 = vmatpush1.msra.mxu0 0.0
        %438 = vmatprep.subr.mxu0 0.0
        %439 = vmatpush1.msra.mxu0 0.0
        %440 = vmatprep.subr.mxu0 0.0
        %441 = vmatpush1.msra.mxu0 0.0
        %442 = vmatprep.subr.mxu0 0.0
        %443 = vmatpush1.msra.mxu0 0.0
        %444 = vmatprep.subr.mxu0 0.0
        %445 = vmatpush1.msra.mxu0 0.0
        %446 = vmatprep.subr.mxu0 0.0
        %447 = vmatpush1.msra.mxu0 0.0
        %448 = vmatprep.mubr.f32.mxu0 0.0
        %449 = vmatmul.mubr.f32.gmra.mrb[0].mxu0 %v379
        %v450 = vpop.f32.mrb[0].mxu0
        %v451 = vadd.f32 0.0, %v450
        %v452 = vpop.f32.mrb[0].mxu0
        %453 = vmatprep.mubr.f32.mxu0 0.0
        %454 = vmatmul.mubr.f32.gmra.mrb[0].mxu0 %v382
        %v455 = vpop.f32.mrb[0].mxu0
        %v456 = vadd.f32 0.0, %v455
        %v457 = vpop.f32.mrb[0].mxu0
        %458 = vdwg.mxu0
        %s459 = scalar_lea.vmem %s139, 16 [#allocation2]
        %460 = vst [vmem:[%s459] sm:$0xff] %v451
        %461 = vst [vmem:[%s459 + $0x8] sm:$0xff] %v456
        %v463 = vsel %vm290, %v286, 0
        %v466 = vsel %vm290, %v287, 0
        %468 = vmatprep.subr.mxu0 0.0
        %469 = vmatpush1.msra.mxu0 %v148
        %470 = vmatprep.subr.mxu0 0.0
        %471 = vmatpush1.msra.mxu0 %v299
        %472 = vmatprep.subr.mxu0 0.0
        %473 = vmatpush1.msra.mxu0 0.0
        %474 = vmatprep.subr.mxu0 0.0
        %475 = vmatpush1.msra.mxu0 0.0
        %476 = vmatprep.subr.mxu0 0.0
        %477 = vmatpush1.msra.mxu0 0.0
        %478 = vmatprep.subr.mxu0 0.0
        %479 = vmatpush1.msra.mxu0 0.0
        %480 = vmatprep.subr.mxu0 0.0
        %481 = vmatpush1.msra.mxu0 0.0
        %482 = vmatprep.subr.mxu0 0.0
        %483 = vmatpush1.msra.mxu0 0.0
        %484 = vmatprep.subr.mxu0 0.0
        %485 = vmatpush1.msra.mxu0 0.0
        %486 = vmatprep.subr.mxu0 0.0
        %487 = vmatpush1.msra.mxu0 0.0
        %488 = vmatprep.subr.mxu0 0.0
        %489 = vmatpush1.msra.mxu0 0.0
        %490 = vmatprep.subr.mxu0 0.0
        %491 = vmatpush1.msra.mxu0 0.0
        %492 = vmatprep.subr.mxu0 0.0
        %493 = vmatpush1.msra.mxu0 0.0
        %494 = vmatprep.subr.mxu0 0.0
        %495 = vmatpush1.msra.mxu0 0.0
        %496 = vmatprep.subr.mxu0 0.0
        %497 = vmatpush1.msra.mxu0 0.0
        %498 = vmatprep.subr.mxu0 0.0
        %499 = vmatpush1.msra.mxu0 0.0
        %500 = vmatprep.subr.mxu0 0.0
        %501 = vmatpush1.msra.mxu0 0.0
        %502 = vmatprep.subr.mxu0 0.0
        %503 = vmatpush1.msra.mxu0 0.0
        %504 = vmatprep.subr.mxu0 0.0
        %505 = vmatpush1.msra.mxu0 0.0
        %506 = vmatprep.subr.mxu0 0.0
        %507 = vmatpush1.msra.mxu0 0.0
        %508 = vmatprep.subr.mxu0 0.0
        %509 = vmatpush1.msra.mxu0 0.0
        %510 = vmatprep.subr.mxu0 0.0
        %511 = vmatpush1.msra.mxu0 0.0
        %512 = vmatprep.subr.mxu0 0.0
        %513 = vmatpush1.msra.mxu0 0.0
        %514 = vmatprep.subr.mxu0 0.0
        %515 = vmatpush1.msra.mxu0 0.0
        %516 = vmatprep.subr.mxu0 0.0
        %517 = vmatpush1.msra.mxu0 0.0
        %518 = vmatprep.subr.mxu0 0.0
        %519 = vmatpush1.msra.mxu0 0.0
        %520 = vmatprep.subr.mxu0 0.0
        %521 = vmatpush1.msra.mxu0 0.0
        %522 = vmatprep.subr.mxu0 0.0
        %523 = vmatpush1.msra.mxu0 0.0
        %524 = vmatprep.subr.mxu0 0.0
        %525 = vmatpush1.msra.mxu0 0.0
        %526 = vmatprep.subr.mxu0 0.0
        %527 = vmatpush1.msra.mxu0 0.0
        %528 = vmatprep.subr.mxu0 0.0
        %529 = vmatpush1.msra.mxu0 0.0
        %530 = vmatprep.subr.mxu0 0.0
        %531 = vmatpush1.msra.mxu0 0.0
        %532 = vmatprep.mubr.f32.mxu0 0.0
        %533 = vmatmul.mubr.f32.gmra.mrb[0].mxu0 %v463
        %v534 = vpop.f32.mrb[0].mxu0
        %v535 = vadd.f32 0.0, %v534
        %v536 = vpop.f32.mrb[0].mxu0
        %537 = vmatprep.mubr.f32.mxu0 0.0
        %538 = vmatmul.mubr.f32.gmra.mrb[0].mxu0 %v466
        %v539 = vpop.f32.mrb[0].mxu0
        %v540 = vadd.f32 0.0, %v539
        %v541 = vpop.f32.mrb[0].mxu0
        %542 = vdwg.mxu0
        %s543 = scalar_lea.vmem %s139, 32 [#allocation2]
        %544 = vst [vmem:[%s543] sm:$0xff] %v535
        %545 = vst [vmem:[%s543 + $0x8] sm:$0xff] %v540
        %v547 = vsel %vm290, %v288, 0
        %v550 = vsel %vm290, %v289, 0
        %552 = vmatprep.subr.mxu0 0.0
        %553 = vmatpush1.msra.mxu0 %v148
        %554 = vmatprep.subr.mxu0 0.0
        %555 = vmatpush1.msra.mxu0 %v299
        %556 = vmatprep.subr.mxu0 0.0
        %557 = vmatpush1.msra.mxu0 0.0
        %558 = vmatprep.subr.mxu0 0.0
        %559 = vmatpush1.msra.mxu0 0.0
        %560 = vmatprep.subr.mxu0 0.0
        %561 = vmatpush1.msra.mxu0 0.0
        %562 = vmatprep.subr.mxu0 0.0
        %563 = vmatpush1.msra.mxu0 0.0
        %564 = vmatprep.subr.mxu0 0.0
        %565 = vmatpush1.msra.mxu0 0.0
        %566 = vmatprep.subr.mxu0 0.0
        %567 = vmatpush1.msra.mxu0 0.0
        %568 = vmatprep.subr.mxu0 0.0
        %569 = vmatpush1.msra.mxu0 0.0
        %570 = vmatprep.subr.mxu0 0.0
        %571 = vmatpush1.msra.mxu0 0.0
        %572 = vmatprep.subr.mxu0 0.0
        %573 = vmatpush1.msra.mxu0 0.0
        %574 = vmatprep.subr.mxu0 0.0
        %575 = vmatpush1.msra.mxu0 0.0
        %576 = vmatprep.subr.mxu0 0.0
        %577 = vmatpush1.msra.mxu0 0.0
        %578 = vmatprep.subr.mxu0 0.0
        %579 = vmatpush1.msra.mxu0 0.0
        %580 = vmatprep.subr.mxu0 0.0
        %581 = vmatpush1.msra.mxu0 0.0
        %582 = vmatprep.subr.mxu0 0.0
        %583 = vmatpush1.msra.mxu0 0.0
        %584 = vmatprep.subr.mxu0 0.0
        %585 = vmatpush1.msra.mxu0 0.0
        %586 = vmatprep.subr.mxu0 0.0
        %587 = vmatpush1.msra.mxu0 0.0
        %588 = vmatprep.subr.mxu0 0.0
        %589 = vmatpush1.msra.mxu0 0.0
        %590 = vmatprep.subr.mxu0 0.0
        %591 = vmatpush1.msra.mxu0 0.0
        %592 = vmatprep.subr.mxu0 0.0
        %593 = vmatpush1.msra.mxu0 0.0
        %594 = vmatprep.subr.mxu0 0.0
        %595 = vmatpush1.msra.mxu0 0.0
        %596 = vmatprep.subr.mxu0 0.0
        %597 = vmatpush1.msra.mxu0 0.0
        %598 = vmatprep.subr.mxu0 0.0
        %599 = vmatpush1.msra.mxu0 0.0
        %600 = vmatprep.subr.mxu0 0.0
        %601 = vmatpush1.msra.mxu0 0.0
        %602 = vmatprep.subr.mxu0 0.0
        %603 = vmatpush1.msra.mxu0 0.0
        %604 = vmatprep.subr.mxu0 0.0
        %605 = vmatpush1.msra.mxu0 0.0
        %606 = vmatprep.subr.mxu0 0.0
        %607 = vmatpush1.msra.mxu0 0.0
        %608 = vmatprep.subr.mxu0 0.0
        %609 = vmatpush1.msra.mxu0 0.0
        %610 = vmatprep.subr.mxu0 0.0
        %611 = vmatpush1.msra.mxu0 0.0
        %612 = vmatprep.subr.mxu0 0.0
        %613 = vmatpush1.msra.mxu0 0.0
        %614 = vmatprep.subr.mxu0 0.0
        %615 = vmatpush1.msra.mxu0 0.0
        %616 = vmatprep.mubr.f32.mxu0 0.0
        %617 = vmatmul.mubr.f32.gmra.mrb[0].mxu0 %v547
        %v618 = vpop.f32.mrb[0].mxu0
        %v619 = vadd.f32 0.0, %v618
        %v620 = vpop.f32.mrb[0].mxu0
        %621 = vmatprep.mubr.f32.mxu0 0.0
        %622 = vmatmul.mubr.f32.gmra.mrb[0].mxu0 %v550
        %v623 = vpop.f32.mrb[0].mxu0
        %v624 = vadd.f32 0.0, %v623
        %v625 = vpop.f32.mrb[0].mxu0
        %626 = vdwg.mxu0
        %s627 = scalar_lea.vmem %s139, 48 [#allocation2]
        %628 = vst [vmem:[%s627] sm:$0xff] %v619
        %629 = vst [vmem:[%s627 + $0x8] sm:$0xff] %v624
        %s630 = sand.u32 %s71, 1
        %s631 = scalar_lea.sflag [#allocation3], %s630
        %s632 = sand.u32 %s71, 1
        %s633 = smul.addr %s632, 64
        %s634 = scalar_lea.vmem [#allocation2], %s633
        // Predicated region
        $region29: #{token_embedding_forward.1} parent=27 // pred_check
          %p635 = pneg %p81
        $region30: #{token_embedding_forward.1} parent=27 // pred_check_branch
          %637 = sbr.rel (%p635) target = $region32
        $region31: #{token_embedding_forward.1} parent=27 // pred_region
          %s638 = smul.u32 4, %s16
          %s640 = ssub.s32 1024, 1024
          %641 = vsyncadd %s631, %s640
          %s642 = smul.addr %s638, 2
          %s643 = smul.addr %s642, 128
          %s644 = scalar_lea.hbm %s2, %s643
          %s645 = sshll.u32 %s634, 4
          %s646 = int_to_ptr.vmem [resolvable:$true] %s645
          %651 = dma.vmem_to_hbm [thread:$0]  %s646, 1024, %s644, %s631, 128, 128, 8
        $region32: #{token_embedding_forward.1} parent=27 // pred_fallthru
          _
      $region28: #{token_embedding_forward.1} parent=5 // pred_fallthru
        _
      %p652 = scmp.le.s32.totalorder 2, %s11
      // Predicated region
      $region33: #{token_embedding_forward.1} parent=5 // pred_check
        %p653 = pneg %p652
      $region34: #{token_embedding_forward.1} parent=5 // pred_check_branch
        %655 = sbr.rel (%p653) target = $region36
      $region35: #{token_embedding_forward.1} parent=5 // pred_region
        %s656 = ssub.s32 %s11, 2
        // Predicated region
        $region37: #{token_embedding_forward.1} parent=35 // pred_check
          %p657 = pneg %p87
        $region38: #{token_embedding_forward.1} parent=35 // pred_check_branch
          %659 = sbr.rel (%p657) target = $region40
        $region39: #{token_embedding_forward.1} parent=35 // pred_region
          %s660 = sand.u32 %s72, 1
          %s661 = scalar_lea.sflag [#allocation3], %s660
          %s662 = sand.u32 %s72, 1
          %s663 = smul.addr %s662, 64
          %s664 = scalar_lea.vmem [#allocation2], %s663
          %665 = dma.done %s661, 1024
        $region40: #{token_embedding_forward.1} parent=35 // pred_fallthru
          _
      $region36: #{token_embedding_forward.1} parent=5 // pred_fallthru
        _
    $region6: #{token_embedding_forward.1} parent=1 // loop_footer
      %s15 = sadd.s32 1, %s11
    $region7: #{token_embedding_forward.1} parent=1 // loop_footer_branch
      %10 = sbr.rel target = $region3
    $region8: #{token_embedding_forward.1} parent=1 // loop_exit
      _
    %666 = vsyncpa [#allocation3], 1
    %s667 = scalar_lea.sflag [#allocation3], 1
    %668 = vsyncpa %s667, 1

</llo_original>
